<compile_context>
chip_gen: v7x
topology: tpu7x:2x2x1
jax: 0.10.0
libtpu: 0.0.40
codegen_flags: <defaults>
</compile_context>

<pallas_src>
import math

import jax
import jax.numpy as jnp
from jax.experimental import pallas as pl
from jax.experimental.pallas import tpu as pltpu


def _node_edge_kernel(h_ref, seladj_ref, wblk_ref, b_ref, edge_ref, node_ref):
    """One lane tile of the folded-batch NodeEdge forward.

    h_ref:      (N, TILE_BD)        node embeddings, batch folded into lanes
    seladj_ref: (E+N, N)            [onehot(ii)+onehot(jj) ; normalized adj]
    wblk_ref:   (TILE_BD, TILE_BD)  kron(I_{TILE_B}, weight.T)
    b_ref:      (1, TILE_BD)        bias tiled per batch within the tile
    edge_ref:   (E, TILE_BD)        fc(h[ii] + h[jj])
    node_ref:   (N, TILE_BD)        adj @ h
    """
    h = h_ref[...]
    seladj = seladj_ref[...]

    # Single MXU pass over h for both the edge gather-sum and the node update:
    # rows [:E] are sel @ h == h[ii] + h[jj], rows [E:] are adj @ h.
    combined = jnp.dot(seladj, h, preferred_element_type=jnp.float32)  # (E+N, TILE_BD)

    num_edges = edge_ref.shape[0]
    node_ref[...] = combined[num_edges:].astype(node_ref.dtype)

    gathered = combined[:num_edges]                                    # (E, TILE_BD)
    edge = jnp.dot(gathered, wblk_ref[...],
                   preferred_element_type=jnp.float32) + b_ref[...]
    edge_ref[...] = edge.astype(edge_ref.dtype)


def choose_tile_bd(batch, embedding_dim, target=512):
    """Lane-tile width: a multiple of 128 lanes AND of D (whole batches per tile)."""
    base = 128 * embedding_dim // math.gcd(128, embedding_dim)
    tile = base
    bd = batch * embedding_dim
    while tile < target and tile < bd:
        tile += base
    return tile


def build_graph_constants(adj_i, adj_j, num_nodes, weight, bias, tile_bd):
    """One-time graph/parameter preprocessing (mirrors torch's cached self.adj)."""
    ii = adj_i[0].astype(jnp.int32)                      # (E,)
    jj = adj_j[0].astype(jnp.int32)                      # (E,)

    # Selection matrix: sel @ h == h[ii] + h[jj]  (handles ii==jj, duplicates).
    sel = (jax.nn.one_hot(ii, num_nodes, dtype=jnp.float32)
           + jax.nn.one_hot(jj, num_nodes, dtype=jnp.float32))          # (E, N)

    # Normalized adjacency, identical to the torch construction (.set, not .add).
    adj = jnp.zeros((num_nodes, num_nodes), jnp.float32)
    adj = adj.at[ii, jj].set(1.0)
    adj = adj.at[jj, ii].set(1.0)
    adj = adj + jnp.eye(num_nodes, dtype=jnp.float32)
    adj = adj / jnp.sum(adj, axis=-1, keepdims=True)                    # (N, N)

    # Stack so the kernel does one MXU pass of [sel; adj] @ h per lane tile.
    seladj = jnp.concatenate([sel, adj], axis=0)                        # (E+N, N)
    # TODO(synk): for N beyond ~2-4k the dense sel/adj become O(N^2); switch to
    # scalar-prefetched edge indices + tiled adj matmul.

    # One diagonal fc block per lane tile (NOT per full batch) + tiled bias.
    embedding_dim = weight.shape[0]
    tile_b = tile_bd // embedding_dim
    wblk = jnp.kron(jnp.eye(tile_b, dtype=weight.dtype), weight.T)      # (TILE_BD, TILE_BD)
    b_tiled = jnp.tile(bias, tile_b).reshape(1, tile_bd)                # (1, TILE_BD)
    return seladj, wblk, b_tiled


def node_edge_forward(h_nodes, seladj, wblk, b_tiled):
    """Pallas equivalent of NodeEdge.forward.

    h_nodes: (B, N, D) float32
    seladj:  (E+N, N)  float32   from build_graph_constants
    wblk:    (TILE_BD, TILE_BD)  float32
    b_tiled: (1, TILE_BD)        float32
    Returns (edge_out (B, E, D), new_h_nodes (B, N, D)).
    """
    batch, num_nodes, dim = h_nodes.shape
    en_rows = seladj.shape[0]
    num_edges = en_rows - num_nodes
    tile_bd = wblk.shape[0]
    tile_b = tile_bd // dim

    # Pad batch up to whole lane tiles => every output store is a full-lane vst.
    num_tiles = -(-batch // tile_b)
    batch_pad = num_tiles * tile_b
    if batch_pad != batch:
        h_nodes = jnp.pad(h_nodes, ((0, batch_pad - batch), (0, 0), (0, 0)))
    bd_pad = batch_pad * dim

    # Lane-dense fold: h_flat[n, b*D + d] = h_nodes[b, n, d].
    h_flat = jnp.transpose(h_nodes, (1, 0, 2)).reshape(num_nodes, bd_pad)

    edge2d, node2d = pl.pallas_call(
        _node_edge_kernel,
        out_shape=(
            jax.ShapeDtypeStruct((num_edges, bd_pad), h_nodes.dtype),
            jax.ShapeDtypeStruct((num_nodes, bd_pad), h_nodes.dtype),
        ),
        grid_spec=pltpu.PrefetchScalarGridSpec(
            num_scalar_prefetch=0,
            grid=(num_tiles,),
            in_specs=[
                # Lane-tiled h columns (pipelined across the grid).
                pl.BlockSpec((num_nodes, tile_bd), lambda i: (0, i)),
                # Resident constants (index_map (0,0) => DMA'd once, not per step).
                pl.BlockSpec((en_rows, num_nodes), lambda i: (0, 0)),
                pl.BlockSpec((tile_bd, tile_bd), lambda i: (0, 0)),
                pl.BlockSpec((1, tile_bd), lambda i: (0, 0)),
            ],
            out_specs=[
                pl.BlockSpec((num_edges, tile_bd), lambda i: (0, i)),
                pl.BlockSpec((num_nodes, tile_bd), lambda i: (0, i)),
            ],
        ),
        compiler_params=pltpu.CompilerParams(
            # Lane tiles are independent -> shard across both TCs on v7x.
            dimension_semantics=("parallel",)),
    )(h_flat, seladj, wblk, b_tiled)

    # Unfold the batch back out and drop padding (cheap glue ops).
    edge_out = jnp.transpose(edge2d.reshape(num_edges, batch_pad, dim),
                             (1, 0, 2))[:batch]                         # (B, E, D)
    node_out = jnp.transpose(node2d.reshape(num_nodes, batch_pad, dim),
                             (1, 0, 2))[:batch]                         # (B, N, D)
    return edge_out, node_out


if __name__ == "__main__":
    B, N, D, E = 2, 16, 8, 8   # embedding_dim = 8 per module default

    key = jax.random.PRNGKey(0)
    k1, k2, k3 = jax.random.split(key, 3)
    h_nodes = jax.random.normal(k1, (B, N, D), jnp.float32)

    # Deterministic "Linear" parameters (torch default-style uniform init).
    bound = 1.0 / (D ** 0.5)
    weight = jax.random.uniform(k2, (D, D), jnp.float32, -bound, bound)
    bias = jax.random.uniform(k3, (D,), jnp.float32, -bound, bound)

    # Edge index lists, shape (1, E) like the torch call convention.
    adj_i = jnp.array([[0, 1, 2, 3, 4, 5, 6, 7]], dtype=jnp.int32)
    adj_j = jnp.array([[1, 2, 3, 4, 5, 6, 7, 0]], dtype=jnp.int32)

    # One-time constants (mirrors torch caching self.adj on first forward).
    TILE_BD = choose_tile_bd(B, D)
    seladj, wblk, b_tiled = build_graph_constants(adj_i, adj_j, N, weight, bias, TILE_BD)

    fwd = jax.jit(node_edge_forward)
    edge_out, node_out = fwd(h_nodes, seladj, wblk, b_tiled)
    jax.block_until_ready((edge_out, node_out))

    # Pure-JAX reference check (same semantics as the torch forward).
    ii, jj = adj_i[0], adj_j[0]
    h1_ref = h_nodes[:, ii]
    h2_ref = h_nodes[:, jj]
    ref_edge = (h1_ref + h2_ref) @ weight.T + bias
    adj_ref = jnp.zeros((N, N), jnp.float32)
    adj_ref = adj_ref.at[ii, jj].set(1.0)
    adj_ref = adj_ref.at[jj, ii].set(1.0)
    adj_ref = adj_ref + jnp.eye(N, dtype=jnp.float32)
    adj_ref = adj_ref / adj_ref.sum(-1, keepdims=True)
    ref_node = jnp.einsum('ik,bkj->bij', adj_ref, h_nodes)

    assert edge_out.shape == (B, E, D) and node_out.shape == (B, N, D)
    assert jnp.allclose(edge_out, ref_edge, atol=1e-5), "edge output mismatch"
    assert jnp.allclose(node_out, ref_node, atol=1e-5), "node output mismatch"
    print("KERNEL_OK")
</pallas_src>

<mosaic_0001>
module attributes {stable_mosaic.version = 11 : i64} {
  func.func @_node_edge_kernel(%arg0: i32, %arg1: memref<16x128xf32, #tpu.memory_space<vmem>>, %arg2: memref<24x16xf32, #tpu.memory_space<vmem>>, %arg3: memref<128x128xf32, #tpu.memory_space<vmem>>, %arg4: memref<1x128xf32, #tpu.memory_space<vmem>>, %arg5: memref<8x128xf32, #tpu.memory_space<vmem>>, %arg6: memref<16x128xf32, #tpu.memory_space<vmem>>) attributes {dimension_semantics = [#tpu.dimension_semantics<parallel>], iteration_bounds = array<i64: 1>, scalar_prefetch = 0 : i64, scratch_operands = 0 : i64, tpu.core_type = #tpu.core_type<tc>, window_params = [{transform_indices = @transform_0, window_bounds = array<i64: 16, 128>}, {pipeline_mode = #tpu.pipeline_mode<synchronous>, transform_indices = @transform_1, window_bounds = array<i64: 24, 16>}, {pipeline_mode = #tpu.pipeline_mode<synchronous>, transform_indices = @transform_2, window_bounds = array<i64: 128, 128>}, {pipeline_mode = #tpu.pipeline_mode<synchronous>, transform_indices = @transform_3, window_bounds = array<i64: 1, 128>}, {transform_indices = @transform_4, window_bounds = array<i64: 8, 128>}, {transform_indices = @transform_5, window_bounds = array<i64: 16, 128>}]} {
    %c0 = arith.constant 0 : index
    %c0_0 = arith.constant 0 : index
    %0 = vector.load %arg1[%c0, %c0_0] : memref<16x128xf32, #tpu.memory_space<vmem>>, vector<16x128xf32>
    %c0_1 = arith.constant 0 : index
    %c0_2 = arith.constant 0 : index
    %1 = vector.load %arg2[%c0_1, %c0_2] : memref<24x16xf32, #tpu.memory_space<vmem>>, vector<24x16xf32>
    %cst = arith.constant dense<0.000000e+00> : vector<24x128xf32>
    %2 = tpu.matmul %1, %0, %cst {dimension_numbers = #tpu.dot_dimension_numbers<[1], [0], [0], [1], [0, 0, 1, 1], [], []>} : vector<24x16xf32>, vector<16x128xf32>, vector<24x128xf32> -> vector<24x128xf32>
    %3 = vector.extract_strided_slice %2 {offsets = [8, 0], sizes = [16, 128], strides = [1, 1]} : vector<24x128xf32> to vector<16x128xf32>
    %c0_3 = arith.constant 0 : index
    %c0_4 = arith.constant 0 : index
    %4 = vector.load %arg6[%c0_3, %c0_4] : memref<16x128xf32, #tpu.memory_space<vmem>>, vector<16x128xf32>
    tpu.vector_store %arg6[%c0_3, %c0_4], %3 {strides = array<i32>} : memref<16x128xf32, #tpu.memory_space<vmem>>, vector<16x128xf32>,
    %5 = vector.extract_strided_slice %2 {offsets = [0, 0], sizes = [8, 128], strides = [1, 1]} : vector<24x128xf32> to vector<8x128xf32>
    %c0_5 = arith.constant 0 : index
    %c0_6 = arith.constant 0 : index
    %6 = vector.load %arg3[%c0_5, %c0_6] : memref<128x128xf32, #tpu.memory_space<vmem>>, vector<128x128xf32>
    %cst_7 = arith.constant dense<0.000000e+00> : vector<8x128xf32>
    %7 = tpu.matmul %5, %6, %cst_7 {dimension_numbers = #tpu.dot_dimension_numbers<[1], [0], [0], [1], [0, 0, 1, 1], [], []>} : vector<8x128xf32>, vector<128x128xf32>, vector<8x128xf32> -> vector<8x128xf32>
    %c0_8 = arith.constant 0 : index
    %c0_9 = arith.constant 0 : index
    %8 = vector.load %arg4[%c0_8, %c0_9] : memref<1x128xf32, #tpu.memory_space<vmem>>, vector<1x128xf32>
    %9 = vector.broadcast %8 : vector<1x128xf32> to vector<8x128xf32>
    %10 = arith.addf %7, %9 : vector<8x128xf32>
    %c0_10 = arith.constant 0 : index
    %c0_11 = arith.constant 0 : index
    %11 = vector.load %arg5[%c0_10, %c0_11] : memref<8x128xf32, #tpu.memory_space<vmem>>, vector<8x128xf32>
    tpu.vector_store %arg5[%c0_10, %c0_11], %10 {strides = array<i32>} : memref<8x128xf32, #tpu.memory_space<vmem>>, vector<8x128xf32>,
    return
  }
  func.func @transform_0(%arg0: i32) -> (i32, i32) {
    %c0_i32 = arith.constant 0 : i32
    %c0_i32_0 = arith.constant 0 : i32
    return %c0_i32, %arg0 : i32, i32
  }
  func.func @transform_1(%arg0: i32) -> (i32, i32) {
    %c0_i32 = arith.constant 0 : i32
    %c0_i32_0 = arith.constant 0 : i32
    %c0_i32_1 = arith.constant 0 : i32
    return %c0_i32, %c0_i32_0 : i32, i32
  }
  func.func @transform_2(%arg0: i32) -> (i32, i32) {
    %c0_i32 = arith.constant 0 : i32
    %c0_i32_0 = arith.constant 0 : i32
    %c0_i32_1 = arith.constant 0 : i32
    return %c0_i32, %c0_i32_0 : i32, i32
  }
  func.func @transform_3(%arg0: i32) -> (i32, i32) {
    %c0_i32 = arith.constant 0 : i32
    %c0_i32_0 = arith.constant 0 : i32
    %c0_i32_1 = arith.constant 0 : i32
    return %c0_i32, %c0_i32_0 : i32, i32
  }
  func.func @transform_4(%arg0: i32) -> (i32, i32) {
    %c0_i32 = arith.constant 0 : i32
    %c0_i32_0 = arith.constant 0 : i32
    return %c0_i32, %arg0 : i32, i32
  }
  func.func @transform_5(%arg0: i32) -> (i32, i32) {
    %c0_i32 = arith.constant 0 : i32
    %c0_i32_0 = arith.constant 0 : i32
    return %c0_i32, %arg0 : i32, i32
  }
}

</mosaic_0001>

<llo_original>
// kernel: node_edge_forward.1
$region0: #{node_edge_forward.1}
  #allocation0 [shape = 'u32[]', space=smem, size = 0x4, offset = 0x4, fixed_abs, tag = 'smem constant byte address 0x4 - core index']
  #allocation1 [shape = 'u32[144,128]{1,0:T(1,128)}', space=vmem, size = 0x12000, scoped, tag = 'internal scratch']
  %s0 = inlined_call_operand.vmem [shape: f32[16,128], index: 0, kind: input, shape index: {}]
  %s1 = inlined_call_operand.vmem [shape: f32[24,16], index: 1, kind: input, shape index: {}]
  %s2 = inlined_call_operand.vmem [shape: f32[128,128], index: 2, kind: input, shape index: {}]
  %s3 = inlined_call_operand.vmem [shape: f32[1,128], index: 3, kind: input, shape index: {}]
  %s4 = inlined_call_operand.vmem [shape: f32[8,128], index: 4, kind: output, shape index: {0}]
  %s5 = inlined_call_operand.vmem [shape: f32[16,128], index: 5, kind: output, shape index: {1}]
  %6 = xla_tuple %s4, %s5
  %s7 = sld [smem:[#allocation0]]
  $region34: #{node_edge_forward.1} parent=0
    _
  %s9 = ssub.s32 1, %s7
  %s10 = scalar_select 0, %s9, %s7
  // Predicated region
  $region2: #{node_edge_forward.1} parent=0 // pred_check
    _
  $region3: #{node_edge_forward.1} parent=0 // pred_check_branch
    %12 = sbr.rel (0) target = $region5
  $region4: #{node_edge_forward.1} parent=0 // pred_region
    _
  $region5: #{node_edge_forward.1} parent=0 // pred_fallthru
    _
  // Predicated region
  $region6: #{node_edge_forward.1} parent=0 // pred_check
    _
  $region7: #{node_edge_forward.1} parent=0 // pred_check_branch
    %14 = sbr.rel (0) target = $region9
  $region8: #{node_edge_forward.1} parent=0 // pred_region
    _
  $region9: #{node_edge_forward.1} parent=0 // pred_fallthru
    _
  // Predicated region
  $region10: #{node_edge_forward.1} parent=0 // pred_check
    _
  $region11: #{node_edge_forward.1} parent=0 // pred_check_branch
    %16 = sbr.rel (0) target = $region13
  $region12: #{node_edge_forward.1} parent=0 // pred_region
    _
  $region13: #{node_edge_forward.1} parent=0 // pred_fallthru
    _
  // Predicated region
  $region14: #{node_edge_forward.1} parent=0 // pred_check
    _
  $region15: #{node_edge_forward.1} parent=0 // pred_check_branch
    %18 = sbr.rel (0) target = $region17
  $region16: #{node_edge_forward.1} parent=0 // pred_region
    _
  $region17: #{node_edge_forward.1} parent=0 // pred_fallthru
    _
  %v19 = vld [vmem:[%s0] sm:$0xff]
  %v20 = vld [vmem:[%s0 + $0x8] sm:$0xff]
  %v21 = vld [vmem:[%s1] sm:$0xff]
  %v22 = vld [vmem:[%s1 + $0x8] sm:$0xff]
  %v23 = vld [vmem:[%s1 + $0x10] sm:$0xff]
  %vm24 = vcmask 130048
  %v26 = vsel %vm24, %v21, 0
  %v29 = vsel %vm24, %v22, 0
  %v32 = vsel %vm24, %v23, 0
  %34 = vmatprep.subr.mxu0 0.0
  %35 = vmatpush1.msra.mxu0 %v19
  %36 = vmatprep.subr.mxu0 0.0
  %37 = vmatpush1.msra.mxu0 %v20
  %38 = vmatprep.subr.mxu0 0.0
  %39 = vmatpush1.msra.mxu0 0.0
  %40 = vmatprep.subr.mxu0 0.0
  %41 = vmatpush1.msra.mxu0 0.0
  %42 = vmatprep.subr.mxu0 0.0
  %43 = vmatpush1.msra.mxu0 0.0
  %44 = vmatprep.subr.mxu0 0.0
  %45 = vmatpush1.msra.mxu0 0.0
  %46 = vmatprep.subr.mxu0 0.0
  %47 = vmatpush1.msra.mxu0 0.0
  %48 = vmatprep.subr.mxu0 0.0
  %49 = vmatpush1.msra.mxu0 0.0
  %50 = vmatprep.subr.mxu0 0.0
  %51 = vmatpush1.msra.mxu0 0.0
  %52 = vmatprep.subr.mxu0 0.0
  %53 = vmatpush1.msra.mxu0 0.0
  %54 = vmatprep.subr.mxu0 0.0
  %55 = vmatpush1.msra.mxu0 0.0
  %56 = vmatprep.subr.mxu0 0.0
  %57 = vmatpush1.msra.mxu0 0.0
  %58 = vmatprep.subr.mxu0 0.0
  %59 = vmatpush1.msra.mxu0 0.0
  %60 = vmatprep.subr.mxu0 0.0
  %61 = vmatpush1.msra.mxu0 0.0
  %62 = vmatprep.subr.mxu0 0.0
  %63 = vmatpush1.msra.mxu0 0.0
  %64 = vmatprep.subr.mxu0 0.0
  %65 = vmatpush1.msra.mxu0 0.0
  %66 = vmatprep.subr.mxu0 0.0
  %67 = vmatpush1.msra.mxu0 0.0
  %68 = vmatprep.subr.mxu0 0.0
  %69 = vmatpush1.msra.mxu0 0.0
  %70 = vmatprep.subr.mxu0 0.0
  %71 = vmatpush1.msra.mxu0 0.0
  %72 = vmatprep.subr.mxu0 0.0
  %73 = vmatpush1.msra.mxu0 0.0
  %74 = vmatprep.subr.mxu0 0.0
  %75 = vmatpush1.msra.mxu0 0.0
  %76 = vmatprep.subr.mxu0 0.0
  %77 = vmatpush1.msra.mxu0 0.0
  %78 = vmatprep.subr.mxu0 0.0
  %79 = vmatpush1.msra.mxu0 0.0
  %80 = vmatprep.subr.mxu0 0.0
  %81 = vmatpush1.msra.mxu0 0.0
  %82 = vmatprep.subr.mxu0 0.0
  %83 = vmatpush1.msra.mxu0 0.0
  %84 = vmatprep.subr.mxu0 0.0
  %85 = vmatpush1.msra.mxu0 0.0
  %86 = vmatprep.subr.mxu0 0.0
  %87 = vmatpush1.msra.mxu0 0.0
  %88 = vmatprep.subr.mxu0 0.0
  %89 = vmatpush1.msra.mxu0 0.0
  %90 = vmatprep.subr.mxu0 0.0
  %91 = vmatpush1.msra.mxu0 0.0
  %92 = vmatprep.subr.mxu0 0.0
  %93 = vmatpush1.msra.mxu0 0.0
  %94 = vmatprep.subr.mxu0 0.0
  %95 = vmatpush1.msra.mxu0 0.0
  %96 = vmatprep.subr.mxu0 0.0
  %97 = vmatpush1.msra.mxu0 0.0
  %98 = vmatprep.mubr.f32.mxu0 0.0
  %99 = vmatmul.mubr.f32.gmra.mrb[0].mxu0 %v26
  %v100 = vpop.f32.mrb[0].mxu0
  %v101 = vadd.f32 0.0, %v100
  %v102 = vpop.f32.mrb[0].mxu0
  %103 = vmatprep.mubr.f32.mxu0 0.0
  %104 = vmatmul.mubr.f32.gmra.mrb[0].mxu0 %v29
  %v105 = vpop.f32.mrb[0].mxu0
  %v106 = vadd.f32 0.0, %v105
  %v107 = vpop.f32.mrb[0].mxu0
  %108 = vmatprep.mubr.f32.mxu0 0.0
  %109 = vmatmul.mubr.f32.gmra.mrb[0].mxu0 %v32
  %v110 = vpop.f32.mrb[0].mxu0
  %v111 = vadd.f32 0.0, %v110
  %v112 = vpop.f32.mrb[0].mxu0
  %113 = vdwg.mxu0
  %114 = vst [vmem:[%s5] sm:$0xff] %v106
  %115 = vst [vmem:[%s5 + $0x8] sm:$0xff] %v111
  %v116 = vld [vmem:[%s2] sm:$0xff]
  %v117 = vld [vmem:[%s2 + $0x8] sm:$0xff]
  %v118 = vld [vmem:[%s2 + $0x10] sm:$0xff]
  %v119 = vld [vmem:[%s2 + $0x18] sm:$0xff]
  %v120 = vld [vmem:[%s2 + $0x20] sm:$0xff]
  %v121 = vld [vmem:[%s2 + $0x28] sm:$0xff]
  %v122 = vld [vmem:[%s2 + $0x30] sm:$0xff]
  %v123 = vld [vmem:[%s2 + $0x38] sm:$0xff]
  %v124 = vld [vmem:[%s2 + $0x40] sm:$0xff]
  %v125 = vld [vmem:[%s2 + $0x48] sm:$0xff]
  %v126 = vld [vmem:[%s2 + $0x50] sm:$0xff]
  %v127 = vld [vmem:[%s2 + $0x58] sm:$0xff]
  %v128 = vld [vmem:[%s2 + $0x60] sm:$0xff]
  %v129 = vld [vmem:[%s2 + $0x68] sm:$0xff]
  %v130 = vld [vmem:[%s2 + $0x70] sm:$0xff]
  %v131 = vld [vmem:[%s2 + $0x78] sm:$0xff]
  %v132 = vld [vmem:[%s3] sm:$0x1]
  %v134 = vlaneseq
  %v135 = vshrl.u32 %v134, 7
  %v136 = vsub.s32 0, %v135
  %v137 = vrot.slane %v132, %v136
  %139 = vmatprep.subr.mxu0 0.0
  %140 = vmatpush1.msra.mxu0 %v116
  %141 = vmatprep.subr.mxu0 0.0
  %142 = vmatpush1.msra.mxu0 %v117
  %143 = vmatprep.subr.mxu0 0.0
  %144 = vmatpush1.msra.mxu0 %v118
  %145 = vmatprep.subr.mxu0 0.0
  %146 = vmatpush1.msra.mxu0 %v119
  %147 = vmatprep.subr.mxu0 0.0
  %148 = vmatpush1.msra.mxu0 %v120
  %149 = vmatprep.subr.mxu0 0.0
  %150 = vmatpush1.msra.mxu0 %v121
  %151 = vmatprep.subr.mxu0 0.0
  %152 = vmatpush1.msra.mxu0 %v122
  %153 = vmatprep.subr.mxu0 0.0
  %154 = vmatpush1.msra.mxu0 %v123
  %155 = vmatprep.subr.mxu0 0.0
  %156 = vmatpush1.msra.mxu0 %v124
  %157 = vmatprep.subr.mxu0 0.0
  %158 = vmatpush1.msra.mxu0 %v125
  %159 = vmatprep.subr.mxu0 0.0
  %160 = vmatpush1.msra.mxu0 %v126
  %161 = vmatprep.subr.mxu0 0.0
  %162 = vmatpush1.msra.mxu0 %v127
  %163 = vmatprep.subr.mxu0 0.0
  %164 = vmatpush1.msra.mxu0 %v128
  %165 = vmatprep.subr.mxu0 0.0
  %166 = vmatpush1.msra.mxu0 %v129
  %167 = vmatprep.subr.mxu0 0.0
  %168 = vmatpush1.msra.mxu0 %v130
  %169 = vmatprep.subr.mxu0 0.0
  %170 = vmatpush1.msra.mxu0 %v131
  %171 = vmatprep.subr.mxu0 0.0
  %172 = vmatpush1.msra.mxu0 0.0
  %173 = vmatprep.subr.mxu0 0.0
  %174 = vmatpush1.msra.mxu0 0.0
  %175 = vmatprep.subr.mxu0 0.0
  %176 = vmatpush1.msra.mxu0 0.0
  %177 = vmatprep.subr.mxu0 0.0
  %178 = vmatpush1.msra.mxu0 0.0
  %179 = vmatprep.subr.mxu0 0.0
  %180 = vmatpush1.msra.mxu0 0.0
  %181 = vmatprep.subr.mxu0 0.0
  %182 = vmatpush1.msra.mxu0 0.0
  %183 = vmatprep.subr.mxu0 0.0
  %184 = vmatpush1.msra.mxu0 0.0
  %185 = vmatprep.subr.mxu0 0.0
  %186 = vmatpush1.msra.mxu0 0.0
  %187 = vmatprep.subr.mxu0 0.0
  %188 = vmatpush1.msra.mxu0 0.0
  %189 = vmatprep.subr.mxu0 0.0
  %190 = vmatpush1.msra.mxu0 0.0
  %191 = vmatprep.subr.mxu0 0.0
  %192 = vmatpush1.msra.mxu0 0.0
  %193 = vmatprep.subr.mxu0 0.0
  %194 = vmatpush1.msra.mxu0 0.0
  %195 = vmatprep.subr.mxu0 0.0
  %196 = vmatpush1.msra.mxu0 0.0
  %197 = vmatprep.subr.mxu0 0.0
  %198 = vmatpush1.msra.mxu0 0.0
  %199 = vmatprep.subr.mxu0 0.0
  %200 = vmatpush1.msra.mxu0 0.0
  %201 = vmatprep.subr.mxu0 0.0
  %202 = vmatpush1.msra.mxu0 0.0
  %203 = vmatprep.mubr.f32.mxu0 0.0
  %204 = vmatmul.mubr.f32.gmra.mrb[0].mxu0 %v101
  %v205 = vpop.f32.mrb[0].mxu0
  %v206 = vadd.f32 %v137, %v205
  %v207 = vpop.f32.mrb[0].mxu0
  %208 = vdwg.mxu0
  %209 = vst [vmem:[%s4] sm:$0xff] %v206
  // Predicated region
  $region18: #{node_edge_forward.1} parent=0 // pred_check
    _
  $region19: #{node_edge_forward.1} parent=0 // pred_check_branch
    %211 = sbr.rel (0) target = $region21
  $region20: #{node_edge_forward.1} parent=0 // pred_region
    _
  $region21: #{node_edge_forward.1} parent=0 // pred_fallthru
    _
  // Predicated region
  $region22: #{node_edge_forward.1} parent=0 // pred_check
    _
  $region23: #{node_edge_forward.1} parent=0 // pred_check_branch
    %213 = sbr.rel (0) target = $region25
  $region24: #{node_edge_forward.1} parent=0 // pred_region
    _
  $region25: #{node_edge_forward.1} parent=0 // pred_fallthru
    _
  // Predicated region
  $region26: #{node_edge_forward.1} parent=0 // pred_check
    _
  $region27: #{node_edge_forward.1} parent=0 // pred_check_branch
    %215 = sbr.rel (0) target = $region29
  $region28: #{node_edge_forward.1} parent=0 // pred_region
    _
  $region29: #{node_edge_forward.1} parent=0 // pred_fallthru
    _
  // Predicated region
  $region30: #{node_edge_forward.1} parent=0 // pred_check
    _
  $region31: #{node_edge_forward.1} parent=0 // pred_check_branch
    %217 = sbr.rel (0) target = $region33
  $region32: #{node_edge_forward.1} parent=0 // pred_region
    _
  $region33: #{node_edge_forward.1} parent=0 // pred_fallthru
    _

</llo_original>
